<compile_context>
chip_gen: v7x
topology: tpu7x:2x2x1
jax: 0.10.0
libtpu: 0.0.40
codegen_flags: <defaults>
</compile_context>

<pallas_src>
import functools

import jax
import jax.numpy as jnp
from jax.experimental import pallas as pl
from jax.experimental.pallas import tpu as pltpu

EPS = 1e-5


def _round_up(x, m):
    return (x + m - 1) // m * m


# --------------------------- Pallas kernels ---------------------------------

def conv_stats_kernel(wt_ref, pt_ref, yt_ref, sum_ref, sumsq_ref):
    """Pass 1: tap-fused conv matmul for one M-tile + per-tile BN partials.

    wt_ref    : (Coutp, K)     transposed conv weights, K = 9*Cin
    pt_ref    : (K, TM)        transposed im2col patches for this M-tile
    yt_ref    : (Coutp, TM)    conv output tile (f32); lane axis = spatial
    sum_ref   : (1, Coutp, 1)  per-tile per-channel sum
    sumsq_ref : (1, Coutp, 1)  per-tile per-channel sum of squares
    """
    acc = jnp.dot(wt_ref[...], pt_ref[...], preferred_element_type=jnp.float32)
    yt_ref[...] = acc
    sum_ref[...] = jnp.sum(acc, axis=1, keepdims=True)[None]
    sumsq_ref[...] = jnp.sum(acc * acc, axis=1, keepdims=True)[None]


def bn_relu_kernel(scale_ref, shift_ref, yt_ref, ot_ref):
    """Pass 2: y * scale + shift (folded BatchNorm) followed by ReLU."""
    y = yt_ref[...] * scale_ref[...] + shift_ref[...]
    ot_ref[...] = jnp.maximum(y, 0.0).astype(ot_ref.dtype)


# ------------------------- conv block wrapper --------------------------------

def conv3x3_bn_relu(x_cnhw, w, gamma, beta, *, block_m=256):
    """One [Conv3x3 -> BN(batch stats) -> ReLU] block, channel-major layout.

    x_cnhw : (Cin, N, H, W) f32
    w      : (3, 3, Cin, Cout) f32 (HWIO)
    gamma, beta : (Cout,) BatchNorm affine parameters
    returns: (Cout, N, H, W) f32
    """
    Cin, N, H, W = x_cnhw.shape
    Cout = w.shape[-1]
    M = N * H * W
    K = 9 * Cin
    Coutp = _round_up(Cout, 8)          # sublane-aligned channel count

    # Tile the flattened spatial axis (lane axis).  block_m=256 is plenty for
    # the toy shapes; for real UNet sizes use 2048-8192 and keep
    # 2*(K*TM) + 2*(Coutp*TM) f32 bytes under the scoped-VMEM budget
    # (32 MiB default on v6e/v7x).
    TM = min(_round_up(block_m, 128), _round_up(M, 128))
    Mp = _round_up(M, TM)
    nmt = Mp // TM

    # Transposed im2col, materialized once per layer: (9*Cin, M).
    # TODO(synk): for large feature maps, replace with halo-aware in-kernel
    # im2col (manual DMA of overlapping row tiles) to avoid the 9x patch
    # HBM traffic; at these channel counts the layer is memory-bound.
    xp = jnp.pad(x_cnhw, ((0, 0), (0, 0), (1, 1), (1, 1)))
    taps = [xp[:, :, dy:dy + H, dx:dx + W]
            for dy in range(3) for dx in range(3)]
    pt = jnp.stack(taps, axis=0).reshape(K, M)          # K order = (tap, cin)
    if Mp != M:
        pt = jnp.pad(pt, ((0, 0), (0, Mp - M)))

    # (3,3,Cin,Cout) -> (Coutp, 9*Cin); K ordering matches `pt`.
    wt = jnp.transpose(w.reshape(9, Cin, Cout), (2, 0, 1)).reshape(Cout, K)
    if Coutp != Cout:
        wt = jnp.pad(wt, ((0, Coutp - Cout), (0, 0)))

    # NOTE: on v6e/v7x, casting `pt`/`wt` to bf16 here (keeping the f32
    # accumulator) halves DMA bytes and hits the fast MXU path; kept f32 to
    # match the PyTorch f32 forward bit-for-bit within tolerance.

    yt, psum, psumsq = pl.pallas_call(
        conv_stats_kernel,
        out_shape=(
            jax.ShapeDtypeStruct((Coutp, Mp), jnp.float32),
            jax.ShapeDtypeStruct((nmt, Coutp, 1), jnp.float32),
            jax.ShapeDtypeStruct((nmt, Coutp, 1), jnp.float32),
        ),
        grid_spec=pltpu.PrefetchScalarGridSpec(
            num_scalar_prefetch=0,
            grid=(nmt,),
            in_specs=[
                pl.BlockSpec((Coutp, K), lambda m: (0, 0)),
                pl.BlockSpec((K, TM), lambda m: (0, m)),
            ],
            out_specs=[
                pl.BlockSpec((Coutp, TM), lambda m: (0, m)),
                pl.BlockSpec((1, Coutp, 1), lambda m: (m, 0, 0)),
                pl.BlockSpec((1, Coutp, 1), lambda m: (m, 0, 0)),
            ],
        ),
        compiler_params=pltpu.CompilerParams(
            dimension_semantics=("parallel",)),
    )(wt, pt)

    # Global batch statistics (biased variance, BatchNorm2d training mode).
    # Padded M columns are zero-valued conv outputs and contribute nothing to
    # the partial sums; divide by the true element count M.  The conv bias
    # cancels exactly under batch-stat BN and is therefore never added.
    sums = jnp.sum(psum[:, :, 0], axis=0)        # (Coutp,)
    sumsq = jnp.sum(psumsq[:, :, 0], axis=0)     # (Coutp,)
    mean = sums / M
    var = sumsq / M - mean * mean
    inv = jax.lax.rsqrt(var + EPS)
    gamma_p = jnp.pad(gamma, (0, Coutp - Cout)) if Coutp != Cout else gamma
    beta_p = jnp.pad(beta, (0, Coutp - Cout)) if Coutp != Cout else beta
    scale = (gamma_p * inv).reshape(Coutp, 1)
    shift = (beta_p - mean * gamma_p * inv).reshape(Coutp, 1)

    ot = pl.pallas_call(
        bn_relu_kernel,
        out_shape=jax.ShapeDtypeStruct((Coutp, Mp), jnp.float32),
        grid_spec=pltpu.PrefetchScalarGridSpec(
            num_scalar_prefetch=0,
            grid=(nmt,),
            in_specs=[
                pl.BlockSpec((Coutp, 1), lambda m: (0, 0)),
                pl.BlockSpec((Coutp, 1), lambda m: (0, 0)),
                pl.BlockSpec((Coutp, TM), lambda m: (0, m)),
            ],
            out_specs=pl.BlockSpec((Coutp, TM), lambda m: (0, m)),
        ),
        compiler_params=pltpu.CompilerParams(
            dimension_semantics=("parallel",)),
    )(scale, shift, yt)

    return ot[:Cout, :M].reshape(Cout, N, H, W)


def unet_conv2_forward(x_nchw, params, *, block_m=256):
    """unetConv2.forward: x (NCHW) -> n=2 conv blocks -> (NCHW)."""
    x = jnp.transpose(x_nchw, (1, 0, 2, 3))        # NCHW -> CNHW (channel-major)
    for (w, _b, gamma, beta) in params:            # conv bias cancels under BN
        x = conv3x3_bn_relu(x, w, gamma, beta, block_m=block_m)
    return jnp.transpose(x, (1, 0, 2, 3))          # CNHW -> NCHW


# ---------------- deterministic parameter init (shapes from __init__) -------

def make_layer_params(key, cin, cout, ks=3):
    k1, k2, k3 = jax.random.split(key, 3)
    fan_in = cin * ks * ks
    # kaiming_normal_(a=0, mode='fan_in'): std = sqrt(2 / fan_in)
    w = jax.random.normal(k1, (ks, ks, cin, cout), jnp.float32) * jnp.sqrt(2.0 / fan_in)
    bound = 1.0 / jnp.sqrt(fan_in)
    b = jax.random.uniform(k2, (cout,), jnp.float32, -bound, bound)
    # BatchNorm: weight ~ N(1.0, 0.02), bias = 0
    gamma = 1.0 + 0.02 * jax.random.normal(k3, (cout,), jnp.float32)
    beta = jnp.zeros((cout,), jnp.float32)
    return w, b, gamma, beta


# ---------------- pure-JAX reference for verification -----------------------

def ref_layer(x_nhwc, w, b, gamma, beta):
    y = jax.lax.conv_general_dilated(
        x_nhwc, w, window_strides=(1, 1), padding=((1, 1), (1, 1)),
        dimension_numbers=("NHWC", "HWIO", "NHWC"))
    y = y + b
    mean = y.mean(axis=(0, 1, 2))
    var = jnp.square(y - mean).mean(axis=(0, 1, 2))
    y = (y - mean) * jax.lax.rsqrt(var + EPS) * gamma + beta
    return jnp.maximum(y, 0.0)


def ref_forward(x_nchw, params):
    x = jnp.transpose(x_nchw, (0, 2, 3, 1))
    for (w, b, gamma, beta) in params:
        x = ref_layer(x, w, b, gamma, beta)
    return jnp.transpose(x, (0, 3, 1, 2))


if __name__ == "__main__":
    # unetConv2(in_size=4, out_size=8, is_batchnorm=True)
    N, Cin, Cout, H, W = 2, 4, 8, 16, 16
    key = jax.random.PRNGKey(0)
    kx, k1, k2 = jax.random.split(key, 3)

    x = jax.random.normal(kx, (N, Cin, H, W), jnp.float32)   # NCHW like PyTorch
    params = [
        make_layer_params(k1, Cin, Cout),
        make_layer_params(k2, Cout, Cout),
    ]

    fwd = jax.jit(functools.partial(unet_conv2_forward, block_m=256))
    out = jax.block_until_ready(fwd(x, params))
    assert out.shape == (N, Cout, H, W), out.shape

    ref = jax.block_until_ready(ref_forward(x, params))
    err = float(jnp.max(jnp.abs(out - ref)))
    assert err < 2e-4, err

    print("KERNEL_OK")
</pallas_src>

<mosaic_0001>
module attributes {stable_mosaic.version = 11 : i64} {
  func.func @conv_stats_kernel(%arg0: i32, %arg1: memref<8x36xf32, #tpu.memory_space<vmem>>, %arg2: memref<36x256xf32, #tpu.memory_space<vmem>>, %arg3: memref<8x256xf32, #tpu.memory_space<vmem>>, %arg4: memref<1x8x1xf32, #tpu.memory_space<vmem>>, %arg5: memref<1x8x1xf32, #tpu.memory_space<vmem>>) attributes {dimension_semantics = [#tpu.dimension_semantics<parallel>], iteration_bounds = array<i64: 2>, scalar_prefetch = 0 : i64, scratch_operands = 0 : i64, tpu.core_type = #tpu.core_type<tc>, window_params = [{pipeline_mode = #tpu.pipeline_mode<synchronous>, transform_indices = @transform_0, window_bounds = array<i64: 8, 36>}, {transform_indices = @transform_1, window_bounds = array<i64: 36, 256>}, {transform_indices = @transform_2, window_bounds = array<i64: 8, 256>}, {transform_indices = @transform_3, window_bounds = array<i64: 1, 8, 1>}, {transform_indices = @transform_4, window_bounds = array<i64: 1, 8, 1>}]} {
    %c0 = arith.constant 0 : index
    %c0_0 = arith.constant 0 : index
    %0 = vector.load %arg1[%c0, %c0_0] : memref<8x36xf32, #tpu.memory_space<vmem>>, vector<8x36xf32>
    %c0_1 = arith.constant 0 : index
    %c0_2 = arith.constant 0 : index
    %1 = vector.load %arg2[%c0_1, %c0_2] : memref<36x256xf32, #tpu.memory_space<vmem>>, vector<36x256xf32>
    %cst = arith.constant dense<0.000000e+00> : vector<8x256xf32>
    %2 = tpu.matmul %0, %1, %cst {dimension_numbers = #tpu.dot_dimension_numbers<[1], [0], [0], [1], [0, 0, 1, 1], [], []>} : vector<8x36xf32>, vector<36x256xf32>, vector<8x256xf32> -> vector<8x256xf32>
    %c0_3 = arith.constant 0 : index
    %c0_4 = arith.constant 0 : index
    %3 = vector.load %arg3[%c0_3, %c0_4] : memref<8x256xf32, #tpu.memory_space<vmem>>, vector<8x256xf32>
    tpu.vector_store %arg3[%c0_3, %c0_4], %2 {strides = array<i32>} : memref<8x256xf32, #tpu.memory_space<vmem>>, vector<8x256xf32>,
    %cst_5 = arith.constant dense<0.000000e+00> : vector<8xf32>
    %4 = vector.multi_reduction <add>, %2, %cst_5 [1] : vector<8x256xf32> to vector<8xf32>
    %5 = vector.shape_cast %4 : vector<8xf32> to vector<8x1xf32>
    %6 = vector.shape_cast %5 : vector<8x1xf32> to vector<1x8x1xf32>
    %c0_6 = arith.constant 0 : index
    %c0_7 = arith.constant 0 : index
    %c0_8 = arith.constant 0 : index
    %7 = vector.load %arg4[%c0_6, %c0_7, %c0_8] : memref<1x8x1xf32, #tpu.memory_space<vmem>>, vector<1x8x1xf32>
    tpu.vector_store %arg4[%c0_6, %c0_7, %c0_8], %6 {strides = array<i32>} : memref<1x8x1xf32, #tpu.memory_space<vmem>>, vector<1x8x1xf32>,
    %8 = arith.mulf %2, %2 : vector<8x256xf32>
    %cst_9 = arith.constant dense<0.000000e+00> : vector<8xf32>
    %9 = vector.multi_reduction <add>, %8, %cst_9 [1] : vector<8x256xf32> to vector<8xf32>
    %10 = vector.shape_cast %9 : vector<8xf32> to vector<8x1xf32>
    %11 = vector.shape_cast %10 : vector<8x1xf32> to vector<1x8x1xf32>
    %c0_10 = arith.constant 0 : index
    %c0_11 = arith.constant 0 : index
    %c0_12 = arith.constant 0 : index
    %12 = vector.load %arg5[%c0_10, %c0_11, %c0_12] : memref<1x8x1xf32, #tpu.memory_space<vmem>>, vector<1x8x1xf32>
    tpu.vector_store %arg5[%c0_10, %c0_11, %c0_12], %11 {strides = array<i32>} : memref<1x8x1xf32, #tpu.memory_space<vmem>>, vector<1x8x1xf32>,
    return
  }
  func.func @transform_0(%arg0: i32) -> (i32, i32) {
    %c0_i32 = arith.constant 0 : i32
    %c0_i32_0 = arith.constant 0 : i32
    %c0_i32_1 = arith.constant 0 : i32
    return %c0_i32, %c0_i32_0 : i32, i32
  }
  func.func @transform_1(%arg0: i32) -> (i32, i32) {
    %c0_i32 = arith.constant 0 : i32
    %c0_i32_0 = arith.constant 0 : i32
    return %c0_i32, %arg0 : i32, i32
  }
  func.func @transform_2(%arg0: i32) -> (i32, i32) {
    %c0_i32 = arith.constant 0 : i32
    %c0_i32_0 = arith.constant 0 : i32
    return %c0_i32, %arg0 : i32, i32
  }
  func.func @transform_3(%arg0: i32) -> (i32, i32, i32) {
    %c0_i32 = arith.constant 0 : i32
    %c0_i32_0 = arith.constant 0 : i32
    %c0_i32_1 = arith.constant 0 : i32
    return %arg0, %c0_i32, %c0_i32_0 : i32, i32, i32
  }
  func.func @transform_4(%arg0: i32) -> (i32, i32, i32) {
    %c0_i32 = arith.constant 0 : i32
    %c0_i32_0 = arith.constant 0 : i32
    %c0_i32_1 = arith.constant 0 : i32
    return %arg0, %c0_i32, %c0_i32_0 : i32, i32, i32
  }
}

module attributes {stable_mosaic.version = 11 : i64} {
  func.func @bn_relu_kernel(%arg0: i32, %arg1: memref<8x1xf32, #tpu.memory_space<vmem>>, %arg2: memref<8x1xf32, #tpu.memory_space<vmem>>, %arg3: memref<8x256xf32, #tpu.memory_space<vmem>>, %arg4: memref<8x256xf32, #tpu.memory_space<vmem>>) attributes {dimension_semantics = [#tpu.dimension_semantics<parallel>], iteration_bounds = array<i64: 2>, scalar_prefetch = 0 : i64, scratch_operands = 0 : i64, tpu.core_type = #tpu.core_type<tc>, window_params = [{pipeline_mode = #tpu.pipeline_mode<synchronous>, transform_indices = @transform_0, window_bounds = array<i64: 8, 1>}, {pipeline_mode = #tpu.pipeline_mode<synchronous>, transform_indices = @transform_1, window_bounds = array<i64: 8, 1>}, {transform_indices = @transform_2, window_bounds = array<i64: 8, 256>}, {transform_indices = @transform_3, window_bounds = array<i64: 8, 256>}]} {
    %c0 = arith.constant 0 : index
    %c0_0 = arith.constant 0 : index
    %0 = vector.load %arg3[%c0, %c0_0] : memref<8x256xf32, #tpu.memory_space<vmem>>, vector<8x256xf32>
    %c0_1 = arith.constant 0 : index
    %c0_2 = arith.constant 0 : index
    %1 = vector.load %arg1[%c0_1, %c0_2] : memref<8x1xf32, #tpu.memory_space<vmem>>, vector<8x1xf32>
    %2 = vector.broadcast %1 : vector<8x1xf32> to vector<8x256xf32>
    %3 = arith.mulf %0, %2 : vector<8x256xf32>
    %c0_3 = arith.constant 0 : index
    %c0_4 = arith.constant 0 : index
    %4 = vector.load %arg2[%c0_3, %c0_4] : memref<8x1xf32, #tpu.memory_space<vmem>>, vector<8x1xf32>
    %5 = vector.broadcast %4 : vector<8x1xf32> to vector<8x256xf32>
    %6 = arith.addf %3, %5 : vector<8x256xf32>
    %cst = arith.constant 0.000000e+00 : f32
    %7 = vector.broadcast %cst : f32 to vector<8x256xf32>
    %8 = arith.maximumf %6, %7 : vector<8x256xf32>
    %c0_5 = arith.constant 0 : index
    %c0_6 = arith.constant 0 : index
    %9 = vector.load %arg4[%c0_5, %c0_6] : memref<8x256xf32, #tpu.memory_space<vmem>>, vector<8x256xf32>
    tpu.vector_store %arg4[%c0_5, %c0_6], %8 {strides = array<i32>} : memref<8x256xf32, #tpu.memory_space<vmem>>, vector<8x256xf32>,
    return
  }
  func.func @transform_0(%arg0: i32) -> (i32, i32) {
    %c0_i32 = arith.constant 0 : i32
    %c0_i32_0 = arith.constant 0 : i32
    %c0_i32_1 = arith.constant 0 : i32
    return %c0_i32, %c0_i32_0 : i32, i32
  }
  func.func @transform_1(%arg0: i32) -> (i32, i32) {
    %c0_i32 = arith.constant 0 : i32
    %c0_i32_0 = arith.constant 0 : i32
    %c0_i32_1 = arith.constant 0 : i32
    return %c0_i32, %c0_i32_0 : i32, i32
  }
  func.func @transform_2(%arg0: i32) -> (i32, i32) {
    %c0_i32 = arith.constant 0 : i32
    %c0_i32_0 = arith.constant 0 : i32
    return %c0_i32, %arg0 : i32, i32
  }
  func.func @transform_3(%arg0: i32) -> (i32, i32) {
    %c0_i32 = arith.constant 0 : i32
    %c0_i32_0 = arith.constant 0 : i32
    return %c0_i32, %arg0 : i32, i32
  }
}

module attributes {stable_mosaic.version = 11 : i64} {
  func.func @conv_stats_kernel(%arg0: i32, %arg1: memref<8x72xf32, #tpu.memory_space<vmem>>, %arg2: memref<72x256xf32, #tpu.memory_space<vmem>>, %arg3: memref<8x256xf32, #tpu.memory_space<vmem>>, %arg4: memref<1x8x1xf32, #tpu.memory_space<vmem>>, %arg5: memref<1x8x1xf32, #tpu.memory_space<vmem>>) attributes {dimension_semantics = [#tpu.dimension_semantics<parallel>], iteration_bounds = array<i64: 2>, scalar_prefetch = 0 : i64, scratch_operands = 0 : i64, tpu.core_type = #tpu.core_type<tc>, window_params = [{pipeline_mode = #tpu.pipeline_mode<synchronous>, transform_indices = @transform_0, window_bounds = array<i64: 8, 72>}, {transform_indices = @transform_1, window_bounds = array<i64: 72, 256>}, {transform_indices = @transform_2, window_bounds = array<i64: 8, 256>}, {transform_indices = @transform_3, window_bounds = array<i64: 1, 8, 1>}, {transform_indices = @transform_4, window_bounds = array<i64: 1, 8, 1>}]} {
    %c0 = arith.constant 0 : index
    %c0_0 = arith.constant 0 : index
    %0 = vector.load %arg1[%c0, %c0_0] : memref<8x72xf32, #tpu.memory_space<vmem>>, vector<8x72xf32>
    %c0_1 = arith.constant 0 : index
    %c0_2 = arith.constant 0 : index
    %1 = vector.load %arg2[%c0_1, %c0_2] : memref<72x256xf32, #tpu.memory_space<vmem>>, vector<72x256xf32>
    %cst = arith.constant dense<0.000000e+00> : vector<8x256xf32>
    %2 = tpu.matmul %0, %1, %cst {dimension_numbers = #tpu.dot_dimension_numbers<[1], [0], [0], [1], [0, 0, 1, 1], [], []>} : vector<8x72xf32>, vector<72x256xf32>, vector<8x256xf32> -> vector<8x256xf32>
    %c0_3 = arith.constant 0 : index
    %c0_4 = arith.constant 0 : index
    %3 = vector.load %arg3[%c0_3, %c0_4] : memref<8x256xf32, #tpu.memory_space<vmem>>, vector<8x256xf32>
    tpu.vector_store %arg3[%c0_3, %c0_4], %2 {strides = array<i32>} : memref<8x256xf32, #tpu.memory_space<vmem>>, vector<8x256xf32>,
    %cst_5 = arith.constant dense<0.000000e+00> : vector<8xf32>
    %4 = vector.multi_reduction <add>, %2, %cst_5 [1] : vector<8x256xf32> to vector<8xf32>
    %5 = vector.shape_cast %4 : vector<8xf32> to vector<8x1xf32>
    %6 = vector.shape_cast %5 : vector<8x1xf32> to vector<1x8x1xf32>
    %c0_6 = arith.constant 0 : index
    %c0_7 = arith.constant 0 : index
    %c0_8 = arith.constant 0 : index
    %7 = vector.load %arg4[%c0_6, %c0_7, %c0_8] : memref<1x8x1xf32, #tpu.memory_space<vmem>>, vector<1x8x1xf32>
    tpu.vector_store %arg4[%c0_6, %c0_7, %c0_8], %6 {strides = array<i32>} : memref<1x8x1xf32, #tpu.memory_space<vmem>>, vector<1x8x1xf32>,
    %8 = arith.mulf %2, %2 : vector<8x256xf32>
    %cst_9 = arith.constant dense<0.000000e+00> : vector<8xf32>
    %9 = vector.multi_reduction <add>, %8, %cst_9 [1] : vector<8x256xf32> to vector<8xf32>
    %10 = vector.shape_cast %9 : vector<8xf32> to vector<8x1xf32>
    %11 = vector.shape_cast %10 : vector<8x1xf32> to vector<1x8x1xf32>
    %c0_10 = arith.constant 0 : index
    %c0_11 = arith.constant 0 : index
    %c0_12 = arith.constant 0 : index
    %12 = vector.load %arg5[%c0_10, %c0_11, %c0_12] : memref<1x8x1xf32, #tpu.memory_space<vmem>>, vector<1x8x1xf32>
    tpu.vector_store %arg5[%c0_10, %c0_11, %c0_12], %11 {strides = array<i32>} : memref<1x8x1xf32, #tpu.memory_space<vmem>>, vector<1x8x1xf32>,
    return
  }
  func.func @transform_0(%arg0: i32) -> (i32, i32) {
    %c0_i32 = arith.constant 0 : i32
    %c0_i32_0 = arith.constant 0 : i32
    %c0_i32_1 = arith.constant 0 : i32
    return %c0_i32, %c0_i32_0 : i32, i32
  }
  func.func @transform_1(%arg0: i32) -> (i32, i32) {
    %c0_i32 = arith.constant 0 : i32
    %c0_i32_0 = arith.constant 0 : i32
    return %c0_i32, %arg0 : i32, i32
  }
  func.func @transform_2(%arg0: i32) -> (i32, i32) {
    %c0_i32 = arith.constant 0 : i32
    %c0_i32_0 = arith.constant 0 : i32
    return %c0_i32, %arg0 : i32, i32
  }
  func.func @transform_3(%arg0: i32) -> (i32, i32, i32) {
    %c0_i32 = arith.constant 0 : i32
    %c0_i32_0 = arith.constant 0 : i32
    %c0_i32_1 = arith.constant 0 : i32
    return %arg0, %c0_i32, %c0_i32_0 : i32, i32, i32
  }
  func.func @transform_4(%arg0: i32) -> (i32, i32, i32) {
    %c0_i32 = arith.constant 0 : i32
    %c0_i32_0 = arith.constant 0 : i32
    %c0_i32_1 = arith.constant 0 : i32
    return %arg0, %c0_i32, %c0_i32_0 : i32, i32, i32
  }
}

</mosaic_0001>

<llo_original>
// kernel: unet_conv2_forward.5
$region0: #{unet_conv2_forward.5}
  #allocation0 [shape = 'u32[]', space=smem, size = 0x4, offset = 0x4, fixed_abs, tag = 'smem constant byte address 0x4 - core index']
  #allocation1 [shape = 'u32[144,128]{1,0:T(1,128)}', space=vmem, size = 0x12000, scoped, tag = 'internal scratch']
  %s0 = inlined_call_operand.vmem [shape: f32[8,1], index: 0, kind: input, shape index: {}]
  %s1 = inlined_call_operand.vmem [shape: f32[8,1], index: 1, kind: input, shape index: {}]
  %s2 = inlined_call_operand.vmem [shape: f32[8,512], index: 2, kind: input, shape index: {}]
  %s3 = inlined_call_operand.vmem [shape: f32[8,512], index: 3, kind: output, shape index: {}]
  %s4 = sld [smem:[#allocation0]]
  $region45: #{unet_conv2_forward.5} parent=0
    _
  %s6 = ssub.s32 1, %s4
  %s7 = scalar_select 0, %s6, %s4
  loop: start=0, step=1, limit=4
  $region2: #{unet_conv2_forward.5} parent=0 // loop_pre_header
    _
  $region3: #{unet_conv2_forward.5} parent=0 // loop_header
    %s9 = sphi 0, %s13
    %p10 = scmp.ge.s32.totalorder %s9, 4
    %s17 = sphi 0, %s17
    %s19 = sphi 0, %s17
    %s20 = sphi 0, %s19
    %s34 = sphi 0, %s20
    %s38 = sphi 0, %s38
    %s40 = sphi 0, %s38
    %s41 = sphi 0, %s40
    %s55 = sphi 0, %s41
    %s61 = sphi 0, %s63
    %s64 = sphi 0, %s61
    %s65 = sphi 0, %s64
    %s81 = sphi 0, %s65
    %s87 = sphi 0, %s89
    %s90 = sphi 0, %s87
    %s91 = sphi 0, %s90
    %s107 = sphi 0, %s91
  $region4: #{unet_conv2_forward.5} parent=0 // loop_header_branch
    %12 = sbr.rel (%p10) target = $region8
  $region5: #{unet_conv2_forward.5} parent=0 // loop_body
    %s14 = ssub.s32 %s9, 1
    %s15 = ssub.s32 %s9, 2
    %s16 = sadd.s32 %s9, 1
    %s18 = sadd.s32 %s17, 1
    %p21 = scmp.eq.s32.totalorder %s9, 1
    %p22 = scmp.ne.s32.totalorder %s17, %s19
    %p23 = scmp.eq.s32.totalorder %s9, 0
    %p24 = por %p22, %p23
    %p25 = scmp.ne.s32.totalorder %s17, %s19
    %p26 = scmp.eq.s32.totalorder %s14, 1
    %p27 = por %p25, %p26
    %p28 = scmp.ne.s32.totalorder %s19, %s20
    %p29 = scmp.eq.s32.totalorder %s14, 0
    %p30 = por %p28, %p29
    %p31 = scmp.ne.s32.totalorder %s19, %s20
    %p32 = scmp.eq.s32.totalorder %s15, 1
    %p33 = por %p31, %p32
    %p35 = scmp.ne.s32.totalorder %s20, %s34
    %p36 = scmp.eq.s32.totalorder %s15, 0
    %p37 = por %p35, %p36
    %s39 = sadd.s32 %s38, 1
    %p42 = scmp.eq.s32.totalorder %s9, 1
    %p43 = scmp.ne.s32.totalorder %s38, %s40
    %p44 = scmp.eq.s32.totalorder %s9, 0
    %p45 = por %p43, %p44
    %p46 = scmp.ne.s32.totalorder %s38, %s40
    %p47 = scmp.eq.s32.totalorder %s14, 1
    %p48 = por %p46, %p47
    %p49 = scmp.ne.s32.totalorder %s40, %s41
    %p50 = scmp.eq.s32.totalorder %s14, 0
    %p51 = por %p49, %p50
    %p52 = scmp.ne.s32.totalorder %s40, %s41
    %p53 = scmp.eq.s32.totalorder %s15, 1
    %p54 = por %p52, %p53
    %p56 = scmp.ne.s32.totalorder %s41, %s55
    %p57 = scmp.eq.s32.totalorder %s15, 0
    %p58 = por %p56, %p57
    %s59 = ssub.s32 %s9, %s16
    %p60 = scmp.eq.s32.totalorder %s59, 0
    %s62 = sadd.s32 %s61, 1
    %s63 = scalar_select %p60, %s61, %s62
    %p66 = pneg %p60
    %p67 = scmp.eq.s32.totalorder %s9, 1
    %p68 = por %p66, %p67
    %p69 = scmp.ne.s32.totalorder %s61, %s64
    %p70 = scmp.eq.s32.totalorder %s9, 0
    %p71 = por %p69, %p70
    %p72 = scmp.ne.s32.totalorder %s61, %s64
    %p73 = scmp.eq.s32.totalorder %s14, 1
    %p74 = por %p72, %p73
    %p75 = scmp.ne.s32.totalorder %s64, %s65
    %p76 = scmp.eq.s32.totalorder %s14, 0
    %p77 = por %p75, %p76
    %p78 = scmp.ne.s32.totalorder %s64, %s65
    %p79 = scmp.eq.s32.totalorder %s15, 1
    %p80 = por %p78, %p79
    %p82 = scmp.ne.s32.totalorder %s65, %s81
    %p83 = scmp.eq.s32.totalorder %s15, 0
    %p84 = por %p82, %p83
    %s85 = ssub.s32 %s9, %s16
    %p86 = scmp.eq.s32.totalorder %s85, 0
    %s88 = sadd.s32 %s87, 1
    %s89 = scalar_select %p86, %s87, %s88
    %p92 = pneg %p86
    %p93 = scmp.eq.s32.totalorder %s9, 1
    %p94 = por %p92, %p93
    %p95 = scmp.ne.s32.totalorder %s87, %s90
    %p96 = scmp.eq.s32.totalorder %s9, 0
    %p97 = por %p95, %p96
    %p98 = scmp.ne.s32.totalorder %s87, %s90
    %p99 = scmp.eq.s32.totalorder %s14, 1
    %p100 = por %p98, %p99
    %p101 = scmp.ne.s32.totalorder %s90, %s91
    %p102 = scmp.eq.s32.totalorder %s14, 0
    %p103 = por %p101, %p102
    %p104 = scmp.ne.s32.totalorder %s90, %s91
    %p105 = scmp.eq.s32.totalorder %s15, 1
    %p106 = por %p104, %p105
    %p108 = scmp.ne.s32.totalorder %s91, %s107
    %p109 = scmp.eq.s32.totalorder %s15, 0
    %p110 = por %p108, %p109
    %p111 = scmp.le.s32.totalorder 1, %s9
    %p112 = scmp.lt.s32.totalorder %s9, 3
    %p113 = pnand %p111, %p112
    %p114 = pneg %p113
    // Predicated region
    $region9: #{unet_conv2_forward.5} parent=5 // pred_check
      _
    $region10: #{unet_conv2_forward.5} parent=5 // pred_check_branch
      %116 = sbr.rel (%p113) target = $region12
    $region11: #{unet_conv2_forward.5} parent=5 // pred_region
      %s117 = ssub.s32 %s9, 1
      // Predicated region
      $region13: #{unet_conv2_forward.5} parent=11 // pred_check
        %p118 = pneg %p30
      $region14: #{unet_conv2_forward.5} parent=11 // pred_check_branch
        %120 = sbr.rel (%p118) target = $region16
      $region15: #{unet_conv2_forward.5} parent=11 // pred_region
        _
      $region16: #{unet_conv2_forward.5} parent=11 // pred_fallthru
        _
      // Predicated region
      $region17: #{unet_conv2_forward.5} parent=11 // pred_check
        %p121 = pneg %p51
      $region18: #{unet_conv2_forward.5} parent=11 // pred_check_branch
        %123 = sbr.rel (%p121) target = $region20
      $region19: #{unet_conv2_forward.5} parent=11 // pred_region
        _
      $region20: #{unet_conv2_forward.5} parent=11 // pred_fallthru
        _
    $region12: #{unet_conv2_forward.5} parent=5 // pred_fallthru
      _
    %p124 = scmp.lt.s32.totalorder %s9, 2
    // Predicated region
    $region21: #{unet_conv2_forward.5} parent=5 // pred_check
      %p125 = pneg %p124
    $region22: #{unet_conv2_forward.5} parent=5 // pred_check_branch
      %127 = sbr.rel (%p125) target = $region24
    $region23: #{unet_conv2_forward.5} parent=5 // pred_region
      // Predicated region
      $region25: #{unet_conv2_forward.5} parent=23 // pred_check
        %p128 = pneg %p71
      $region26: #{unet_conv2_forward.5} parent=23 // pred_check_branch
        %130 = sbr.rel (%p128) target = $region28
      $region27: #{unet_conv2_forward.5} parent=23 // pred_region
        %s131 = smul.u32 2, %s9
        %p132 = scmp.lt.s32.totalorder %s131, 3
        %s133 = scalar_select %p132, %s131, 3
        %s134 = smul.addr %s133, 8
        %s135 = scalar_lea.vmem %s2, %s134
        %s136 = smul.u32 2, %s9
      $region28: #{unet_conv2_forward.5} parent=23 // pred_fallthru
        _
    $region24: #{unet_conv2_forward.5} parent=5 // pred_fallthru
      _
    %p137 = scmp.le.s32.totalorder 1, %s9
    %p138 = scmp.lt.s32.totalorder %s9, 3
    %p139 = pnand %p137, %p138
    %p140 = pneg %p139
    // Predicated region
    $region29: #{unet_conv2_forward.5} parent=5 // pred_check
      _
    $region30: #{unet_conv2_forward.5} parent=5 // pred_check_branch
      %142 = sbr.rel (%p139) target = $region32
    $region31: #{unet_conv2_forward.5} parent=5 // pred_region
      %s143 = ssub.s32 %s9, 1
      %p144 = pneg %p30
      %p145 = pneg %p27
      %p146 = pneg %p51
      %p147 = pneg %p48
      %s148 = smul.u32 2, %s14
      %p149 = scmp.lt.s32.totalorder %s148, 3
      %s150 = scalar_select %p149, %s148, 3
      %s151 = smul.addr %s150, 8
      %s152 = scalar_lea.vmem %s2, %s151
      %p153 = pneg %p77
      %p154 = pneg %p74
      %p155 = pneg %p103
      %p156 = pneg %p100
      %s157 = smul.u32 2, %s14
      %p158 = scmp.lt.s32.totalorder %s157, 3
      %s159 = scalar_select %p158, %s157, 3
      %s160 = smul.addr %s159, 8
      %s161 = scalar_lea.vmem %s3, %s160
      %s162 = smul.u32 2, %s14
      %p163 = scmp.lt.s32.totalorder %s162, 3
      %s164 = scalar_select %p163, %s162, 3
      %s165 = smul.addr %s164, 8
      %s166 = scalar_lea.vmem %s2, %s165
      %s167 = smul.u32 2, %s14
      %s168 = smul.u32 2, %s14
      %p169 = scmp.lt.s32.totalorder %s168, 3
      %s170 = scalar_select %p169, %s168, 3
      %s171 = smul.addr %s170, 8
      %s172 = scalar_lea.vmem %s3, %s171
      %s173 = smul.u32 2, %s14
      %v174 = vld [vmem:[%s166] sm:$0xff]
      %v175 = vld [vmem:[%s166 + $0x8] sm:$0xff]
      %v176 = vld [vmem:[%s0] sm:$0xff]
      %178 = vset.pattern.permute.xlu0 0
      %179 = vperm.xlu0 %178, %v176
      %v180 = vpop.permute.xlu0 %179
      %v182 = vmul.f32 %v174, %v180
      %v183 = vmul.f32 %v175, %v180
      %v184 = vld [vmem:[%s1] sm:$0xff]
      %186 = vset.pattern.permute.xlu0 0
      %187 = vperm.xlu0 %186, %v184
      %v188 = vpop.permute.xlu0 %187
      %v190 = vadd.f32 %v182, %v188
      %v191 = vadd.f32 %v183, %v188
      %v192 = vmax.f32 %v190, 0.0
      %v193 = vmax.f32 %v191, 0.0
      %194 = vst [vmem:[%s172] sm:$0xff] %v192
      %195 = vst [vmem:[%s172 + $0x8] sm:$0xff] %v193
      %s196 = smul.u32 2, %s14
      %p197 = scmp.lt.s32.totalorder %s196, 3
      %s198 = scalar_select %p197, %s196, 3
      %s199 = smul.addr %s198, 8
      %s200 = scalar_lea.vmem %s3, %s199
      // Predicated region
      $region33: #{unet_conv2_forward.5} parent=31 // pred_check
        %p201 = pneg %p100
      $region34: #{unet_conv2_forward.5} parent=31 // pred_check_branch
        %203 = sbr.rel (%p201) target = $region36
      $region35: #{unet_conv2_forward.5} parent=31 // pred_region
        %s204 = smul.u32 2, %s14
      $region36: #{unet_conv2_forward.5} parent=31 // pred_fallthru
        _
    $region32: #{unet_conv2_forward.5} parent=5 // pred_fallthru
      _
    %p205 = scmp.le.s32.totalorder 2, %s9
    // Predicated region
    $region37: #{unet_conv2_forward.5} parent=5 // pred_check
      %p206 = pneg %p205
    $region38: #{unet_conv2_forward.5} parent=5 // pred_check_branch
      %208 = sbr.rel (%p206) target = $region40
    $region39: #{unet_conv2_forward.5} parent=5 // pred_region
      %s209 = ssub.s32 %s9, 2
      // Predicated region
      $region41: #{unet_conv2_forward.5} parent=39 // pred_check
        %p210 = pneg %p106
      $region42: #{unet_conv2_forward.5} parent=39 // pred_check_branch
        %212 = sbr.rel (%p210) target = $region44
      $region43: #{unet_conv2_forward.5} parent=39 // pred_region
        %s213 = smul.u32 2, %s15
        %p214 = scmp.lt.s32.totalorder %s213, 3
        %s215 = scalar_select %p214, %s213, 3
        %s216 = smul.addr %s215, 8
        %s217 = scalar_lea.vmem %s3, %s216
      $region44: #{unet_conv2_forward.5} parent=39 // pred_fallthru
        _
    $region40: #{unet_conv2_forward.5} parent=5 // pred_fallthru
      _
  $region6: #{unet_conv2_forward.5} parent=0 // loop_footer
    %s13 = sadd.s32 1, %s9
  $region7: #{unet_conv2_forward.5} parent=0 // loop_footer_branch
    %8 = sbr.rel target = $region3
  $region8: #{unet_conv2_forward.5} parent=0 // loop_exit
    _

// kernel: unet_conv2_forward.4
$region0: #{unet_conv2_forward.4}
  #allocation0 [shape = 'u32[]', space=smem, size = 0x4, offset = 0x4, fixed_abs, tag = 'smem constant byte address 0x4 - core index']
  #allocation1 [shape = 'u32[144,128]{1,0:T(1,128)}', space=vmem, size = 0x12000, scoped, tag = 'internal scratch']
  %s0 = inlined_call_operand.vmem [shape: f32[8,36], index: 0, kind: input, shape index: {}]
  %s1 = inlined_call_operand.vmem [shape: f32[36,512], index: 1, kind: input, shape index: {}]
  %s2 = inlined_call_operand.vmem [shape: f32[8,512], index: 2, kind: output, shape index: {0}]
  %s3 = inlined_call_operand.vmem [shape: f32[2,8,1], index: 3, kind: output, shape index: {1}]
  %s4 = inlined_call_operand.vmem [shape: f32[2,8,1], index: 4, kind: output, shape index: {2}]
  %5 = xla_tuple %s2, %s3, %s4
  %s6 = sld [smem:[#allocation0]]
  $region80: #{unet_conv2_forward.4} parent=0
    _
  %s8 = ssub.s32 1, %s6
  %s9 = scalar_select 0, %s8, %s6
  $region1: #{unet_conv2_forward.4} parent=0
    #allocation2 [shape = 'u8[81920]{0}', space=vmem, size = 0x14000, scoped, tag = 'input window, operand 1']
    loop: start=0, step=1, limit=4
    $region2: #{unet_conv2_forward.4} parent=1 // loop_pre_header
      _
    $region3: #{unet_conv2_forward.4} parent=1 // loop_header
      %s11 = sphi 0, %s15
      %p12 = scmp.ge.s32.totalorder %s11, 4
      %s19 = sphi 0, %s19
      %s21 = sphi 0, %s19
      %s22 = sphi 0, %s21
      %s36 = sphi 0, %s22
      %s42 = sphi 0, %s44
      %s45 = sphi 0, %s42
      %s46 = sphi 0, %s45
      %s62 = sphi 0, %s46
      %s68 = sphi 0, %s70
      %s71 = sphi 0, %s68
      %s72 = sphi 0, %s71
      %s88 = sphi 0, %s72
      %s94 = sphi 0, %s96
      %s97 = sphi 0, %s94
      %s98 = sphi 0, %s97
      %s114 = sphi 0, %s98
      %s120 = sphi 0, %s122
      %s123 = sphi 0, %s120
      %s124 = sphi 0, %s123
      %s140 = sphi 0, %s124
    $region4: #{unet_conv2_forward.4} parent=1 // loop_header_branch
      %14 = sbr.rel (%p12) target = $region8
    $region5: #{unet_conv2_forward.4} parent=1 // loop_body
      %s16 = ssub.s32 %s11, 1
      %s17 = ssub.s32 %s11, 2
      %s18 = sadd.s32 %s11, 1
      %s20 = sadd.s32 %s19, 1
      %p23 = scmp.eq.s32.totalorder %s11, 1
      %p24 = scmp.ne.s32.totalorder %s19, %s21
      %p25 = scmp.eq.s32.totalorder %s11, 0
      %p26 = por %p24, %p25
      %p27 = scmp.ne.s32.totalorder %s19, %s21
      %p28 = scmp.eq.s32.totalorder %s16, 1
      %p29 = por %p27, %p28
      %p30 = scmp.ne.s32.totalorder %s21, %s22
      %p31 = scmp.eq.s32.totalorder %s16, 0
      %p32 = por %p30, %p31
      %p33 = scmp.ne.s32.totalorder %s21, %s22
      %p34 = scmp.eq.s32.totalorder %s17, 1
      %p35 = por %p33, %p34
      %p37 = scmp.ne.s32.totalorder %s22, %s36
      %p38 = scmp.eq.s32.totalorder %s17, 0
      %p39 = por %p37, %p38
      %s40 = ssub.s32 %s11, %s18
      %p41 = scmp.eq.s32.totalorder %s40, 0
      %s43 = sadd.s32 %s42, 1
      %s44 = scalar_select %p41, %s42, %s43
      %p47 = pneg %p41
      %p48 = scmp.eq.s32.totalorder %s11, 1
      %p49 = por %p47, %p48
      %p50 = scmp.ne.s32.totalorder %s42, %s45
      %p51 = scmp.eq.s32.totalorder %s11, 0
      %p52 = por %p50, %p51
      %p53 = scmp.ne.s32.totalorder %s42, %s45
      %p54 = scmp.eq.s32.totalorder %s16, 1
      %p55 = por %p53, %p54
      %p56 = scmp.ne.s32.totalorder %s45, %s46
      %p57 = scmp.eq.s32.totalorder %s16, 0
      %p58 = por %p56, %p57
      %p59 = scmp.ne.s32.totalorder %s45, %s46
      %p60 = scmp.eq.s32.totalorder %s17, 1
      %p61 = por %p59, %p60
      %p63 = scmp.ne.s32.totalorder %s46, %s62
      %p64 = scmp.eq.s32.totalorder %s17, 0
      %p65 = por %p63, %p64
      %s66 = ssub.s32 %s11, %s18
      %p67 = scmp.eq.s32.totalorder %s66, 0
      %s69 = sadd.s32 %s68, 1
      %s70 = scalar_select %p67, %s68, %s69
      %p73 = pneg %p67
      %p74 = scmp.eq.s32.totalorder %s11, 1
      %p75 = por %p73, %p74
      %p76 = scmp.ne.s32.totalorder %s68, %s71
      %p77 = scmp.eq.s32.totalorder %s11, 0
      %p78 = por %p76, %p77
      %p79 = scmp.ne.s32.totalorder %s68, %s71
      %p80 = scmp.eq.s32.totalorder %s16, 1
      %p81 = por %p79, %p80
      %p82 = scmp.ne.s32.totalorder %s71, %s72
      %p83 = scmp.eq.s32.totalorder %s16, 0
      %p84 = por %p82, %p83
      %p85 = scmp.ne.s32.totalorder %s71, %s72
      %p86 = scmp.eq.s32.totalorder %s17, 1
      %p87 = por %p85, %p86
      %p89 = scmp.ne.s32.totalorder %s72, %s88
      %p90 = scmp.eq.s32.totalorder %s17, 0
      %p91 = por %p89, %p90
      %s92 = ssub.s32 %s11, %s18
      %p93 = scmp.eq.s32.totalorder %s92, 0
      %s95 = sadd.s32 %s94, 1
      %s96 = scalar_select %p93, %s94, %s95
      %p99 = pneg %p93
      %p100 = scmp.eq.s32.totalorder %s11, 1
      %p101 = por %p99, %p100
      %p102 = scmp.ne.s32.totalorder %s94, %s97
      %p103 = scmp.eq.s32.totalorder %s11, 0
      %p104 = por %p102, %p103
      %p105 = scmp.ne.s32.totalorder %s94, %s97
      %p106 = scmp.eq.s32.totalorder %s16, 1
      %p107 = por %p105, %p106
      %p108 = scmp.ne.s32.totalorder %s97, %s98
      %p109 = scmp.eq.s32.totalorder %s16, 0
      %p110 = por %p108, %p109
      %p111 = scmp.ne.s32.totalorder %s97, %s98
      %p112 = scmp.eq.s32.totalorder %s17, 1
      %p113 = por %p111, %p112
      %p115 = scmp.ne.s32.totalorder %s98, %s114
      %p116 = scmp.eq.s32.totalorder %s17, 0
      %p117 = por %p115, %p116
      %s118 = ssub.s32 %s11, %s18
      %p119 = scmp.eq.s32.totalorder %s118, 0
      %s121 = sadd.s32 %s120, 1
      %s122 = scalar_select %p119, %s120, %s121
      %p125 = pneg %p119
      %p126 = scmp.eq.s32.totalorder %s11, 1
      %p127 = por %p125, %p126
      %p128 = scmp.ne.s32.totalorder %s120, %s123
      %p129 = scmp.eq.s32.totalorder %s11, 0
      %p130 = por %p128, %p129
      %p131 = scmp.ne.s32.totalorder %s120, %s123
      %p132 = scmp.eq.s32.totalorder %s16, 1
      %p133 = por %p131, %p132
      %p134 = scmp.ne.s32.totalorder %s123, %s124
      %p135 = scmp.eq.s32.totalorder %s16, 0
      %p136 = por %p134, %p135
      %p137 = scmp.ne.s32.totalorder %s123, %s124
      %p138 = scmp.eq.s32.totalorder %s17, 1
      %p139 = por %p137, %p138
      %p141 = scmp.ne.s32.totalorder %s124, %s140
      %p142 = scmp.eq.s32.totalorder %s17, 0
      %p143 = por %p141, %p142
      %p144 = scmp.le.s32.totalorder 1, %s11
      %p145 = scmp.lt.s32.totalorder %s11, 3
      %p146 = pnand %p144, %p145
      %p147 = pneg %p146
      // Predicated region
      $region9: #{unet_conv2_forward.4} parent=5 // pred_check
        _
      $region10: #{unet_conv2_forward.4} parent=5 // pred_check_branch
        %149 = sbr.rel (%p146) target = $region12
      $region11: #{unet_conv2_forward.4} parent=5 // pred_region
        %s150 = ssub.s32 %s11, 1
        // Predicated region
        $region13: #{unet_conv2_forward.4} parent=11 // pred_check
          %p151 = pneg %p32
        $region14: #{unet_conv2_forward.4} parent=11 // pred_check_branch
          %153 = sbr.rel (%p151) target = $region16
        $region15: #{unet_conv2_forward.4} parent=11 // pred_region
          _
        $region16: #{unet_conv2_forward.4} parent=11 // pred_fallthru
          _
      $region12: #{unet_conv2_forward.4} parent=5 // pred_fallthru
        _
      %p154 = scmp.lt.s32.totalorder %s11, 2
      // Predicated region
      $region17: #{unet_conv2_forward.4} parent=5 // pred_check
        %p155 = pneg %p154
      $region18: #{unet_conv2_forward.4} parent=5 // pred_check_branch
        %157 = sbr.rel (%p155) target = $region20
      $region19: #{unet_conv2_forward.4} parent=5 // pred_region
        // Predicated region
        $region21: #{unet_conv2_forward.4} parent=19 // pred_check
          %p158 = pneg %p52
        $region22: #{unet_conv2_forward.4} parent=19 // pred_check_branch
          %160 = sbr.rel (%p158) target = $region24
        $region23: #{unet_conv2_forward.4} parent=19 // pred_region
          %s161 = sand.u32 %s42, 1
          %s162 = sand.u32 %s42, 1
          %s163 = smul.addr %s162, 80
          %s164 = scalar_lea.vmem [#allocation2], %s163
          %s165 = smul.u32 2, %s11
          %s166 = smul.addr %s165, 8
          %s167 = scalar_lea.vmem %s1, %s166
          // Predicated region
          $region25: #{unet_conv2_forward.4} parent=23 // pred_check
            _
          $region26: #{unet_conv2_forward.4} parent=23 // pred_check_branch
            %169 = sbr.rel (0) target = $region28
          $region27: #{unet_conv2_forward.4} parent=23 // pred_region
            // Predicated region
            $region29: #{unet_conv2_forward.4} parent=27 // pred_check
              _
            $region30: #{unet_conv2_forward.4} parent=27 // pred_check_branch
              %171 = sbr.rel (0) target = $region32
            $region31: #{unet_conv2_forward.4} parent=27 // pred_region
              loop: start=0, step=1, limit=1
              $region33: #{unet_conv2_forward.4} parent=31 // loop_pre_header
                _
              $region34: #{unet_conv2_forward.4} parent=31 // loop_header
                %s173 = sphi 0, %s177
                %p174 = scmp.ge.s32.totalorder %s173, 1
                %s178 = sphi %s167, %s167
                %s179 = sphi %s164, %s164
              $region35: #{unet_conv2_forward.4} parent=31 // loop_header_branch
                %176 = sbr.rel (%p174) target = $region39
              $region36: #{unet_conv2_forward.4} parent=31 // loop_body
                %v180 = vld [vmem:[%s178] sm:$0xff]
                %181 = vst [vmem:[%s179] sm:$0xff] %v180
                %v182 = vld [vmem:[%s178 + $0x8] sm:$0xff]
                %183 = vst [vmem:[%s179 + $0x8] sm:$0xff] %v182
                %v184 = vld [vmem:[%s178 + $0x20] sm:$0xff]
                %185 = vst [vmem:[%s179 + $0x10] sm:$0xff] %v184
                %v186 = vld [vmem:[%s178 + $0x28] sm:$0xff]
                %187 = vst [vmem:[%s179 + $0x18] sm:$0xff] %v186
                %v188 = vld [vmem:[%s178 + $0x40] sm:$0xff]
                %189 = vst [vmem:[%s179 + $0x20] sm:$0xff] %v188
                %v190 = vld [vmem:[%s178 + $0x48] sm:$0xff]
                %191 = vst [vmem:[%s179 + $0x28] sm:$0xff] %v190
                %v192 = vld [vmem:[%s178 + $0x60] sm:$0xff]
                %193 = vst [vmem:[%s179 + $0x30] sm:$0xff] %v192
                %v194 = vld [vmem:[%s178 + $0x68] sm:$0xff]
                %195 = vst [vmem:[%s179 + $0x38] sm:$0xff] %v194
                %v196 = vld [vmem:[%s178 + $0x80] sm:$0xff]
                %197 = vst [vmem:[%s179 + $0x40] sm:$0xff] %v196
                %v198 = vld [vmem:[%s178 + $0x88] sm:$0xff]
                %199 = vst [vmem:[%s179 + $0x48] sm:$0xff] %v198
              $region37: #{unet_conv2_forward.4} parent=31 // loop_footer
                %s177 = sadd.s32 1, %s173
              $region38: #{unet_conv2_forward.4} parent=31 // loop_footer_branch
                %172 = sbr.rel target = $region34
              $region39: #{unet_conv2_forward.4} parent=31 // loop_exit
                _
            $region32: #{unet_conv2_forward.4} parent=27 // pred_fallthru
              _
            // Predicated region
            $region40: #{unet_conv2_forward.4} parent=27 // pred_check
              _
            $region41: #{unet_conv2_forward.4} parent=27 // pred_check_branch
              %201 = sbr.rel target = $region43
            $region42: #{unet_conv2_forward.4} parent=27 // pred_region
              _
            $region43: #{unet_conv2_forward.4} parent=27 // pred_fallthru
              _
          $region28: #{unet_conv2_forward.4} parent=23 // pred_fallthru
            _
          %202 = vnop
        $region24: #{unet_conv2_forward.4} parent=19 // pred_fallthru
          _
      $region20: #{unet_conv2_forward.4} parent=5 // pred_fallthru
        _
      %p203 = scmp.le.s32.totalorder 1, %s11
      %p204 = scmp.lt.s32.totalorder %s11, 3
      %p205 = pnand %p203, %p204
      %p206 = pneg %p205
      // Predicated region
      $region44: #{unet_conv2_forward.4} parent=5 // pred_check
        _
      $region45: #{unet_conv2_forward.4} parent=5 // pred_check_branch
        %208 = sbr.rel (%p205) target = $region47
      $region46: #{unet_conv2_forward.4} parent=5 // pred_region
        %s209 = ssub.s32 %s11, 1
        %s210 = sand.u32 %s45, 1
        %s211 = sand.u32 %s45, 1
        %s212 = smul.addr %s211, 80
        %s213 = scalar_lea.vmem [#allocation2], %s212
        // Predicated region
        $region48: #{unet_conv2_forward.4} parent=46 // pred_check
          %p214 = pneg %p58
        $region49: #{unet_conv2_forward.4} parent=46 // pred_check_branch
          %216 = sbr.rel (%p214) target = $region51
        $region50: #{unet_conv2_forward.4} parent=46 // pred_region
          _
        $region51: #{unet_conv2_forward.4} parent=46 // pred_fallthru
          _
        %p217 = pneg %p32
        %p218 = pneg %p29
        %s219 = sand.u32 %s45, 1
        %s220 = sand.u32 %s45, 1
        %s221 = smul.addr %s220, 80
        %s222 = scalar_lea.vmem [#allocation2], %s221
        %p223 = pneg %p58
        %p224 = pneg %p55
        %p225 = pneg %p84
        %p226 = pneg %p81
        %s227 = smul.u32 2, %s16
        %p228 = scmp.lt.s32.totalorder %s227, 3
        %s229 = scalar_select %p228, %s227, 3
        %s230 = smul.addr %s229, 8
        %s231 = scalar_lea.vmem %s2, %s230
        %p232 = pneg %p110
        %p233 = pneg %p107
        %p234 = scmp.lt.s32.totalorder %s16, 1
        %s235 = scalar_select %p234, %s16, 1
        %s236 = smul.addr %s235, 8
        %s237 = scalar_lea.vmem %s3, %s236
        %p238 = pneg %p136
        %p239 = pneg %p133
        %p240 = scmp.lt.s32.totalorder %s16, 1
        %s241 = scalar_select %p240, %s16, 1
        %s242 = smul.addr %s241, 8
        %s243 = scalar_lea.vmem %s4, %s242
        %s244 = smul.u32 2, %s16
        %s245 = smul.u32 2, %s16
        %p246 = scmp.lt.s32.totalorder %s245, 3
        %s247 = scalar_select %p246, %s245, 3
        %s248 = smul.addr %s247, 8
        %s249 = scalar_lea.vmem %s2, %s248
        %s250 = smul.u32 2, %s16
        %p251 = scmp.lt.s32.totalorder %s16, 1
        %s252 = scalar_select %p251, %s16, 1
        %s253 = smul.addr %s252, 8
        %s254 = scalar_lea.vmem %s3, %s253
        %p255 = scmp.lt.s32.totalorder %s16, 1
        %s256 = scalar_select %p255, %s16, 1
        %s257 = smul.addr %s256, 8
        %s258 = scalar_lea.vmem %s4, %s257
        %v259 = vld [vmem:[%s0] sm:$0xff]
        %v260 = vld [vmem:[%s213] sm:$0xff]
        %v261 = vld [vmem:[%s213 + $0x8] sm:$0xff]
        %v262 = vld [vmem:[%s213 + $0x10] sm:$0xff]
        %v263 = vld [vmem:[%s213 + $0x18] sm:$0xff]
        %v264 = vld [vmem:[%s213 + $0x20] sm:$0xff]
        %v265 = vld [vmem:[%s213 + $0x28] sm:$0xff]
        %v266 = vld [vmem:[%s213 + $0x30] sm:$0xff]
        %v267 = vld [vmem:[%s213 + $0x38] sm:$0xff]
        %v268 = vld [vmem:[%s213 + $0x40] sm:$0xf]
        %v269 = vld [vmem:[%s213 + $0x48] sm:$0xf]
        %vm270 = vcmask 293888
        %v272 = vsel %vm270, %v259, 0
        %vm274 = vcmask 1043456
        %v276 = vsel %vm274, %v268, 0
        %v279 = vsel %vm274, %v269, 0
        %281 = vmatprep.subr.mxu0 %v261
        %282 = vmatpush1.msra.mxu0 %v260
        %283 = vmatprep.subr.mxu0 %v263
        %284 = vmatpush1.msra.mxu0 %v262
        %285 = vmatprep.subr.mxu0 %v265
        %286 = vmatpush1.msra.mxu0 %v264
        %287 = vmatprep.subr.mxu0 %v267
        %288 = vmatpush1.msra.mxu0 %v266
        %289 = vmatprep.subr.mxu0 %v279
        %290 = vmatpush1.msra.mxu0 %v276
        %291 = vmatprep.subr.mxu0 0.0
        %292 = vmatpush1.msra.mxu0 0.0
        %293 = vmatprep.subr.mxu0 0.0
        %294 = vmatpush1.msra.mxu0 0.0
        %295 = vmatprep.subr.mxu0 0.0
        %296 = vmatpush1.msra.mxu0 0.0
        %297 = vmatprep.subr.mxu0 0.0
        %298 = vmatpush1.msra.mxu0 0.0
        %299 = vmatprep.subr.mxu0 0.0
        %300 = vmatpush1.msra.mxu0 0.0
        %301 = vmatprep.subr.mxu0 0.0
        %302 = vmatpush1.msra.mxu0 0.0
        %303 = vmatprep.subr.mxu0 0.0
        %304 = vmatpush1.msra.mxu0 0.0
        %305 = vmatprep.subr.mxu0 0.0
        %306 = vmatpush1.msra.mxu0 0.0
        %307 = vmatprep.subr.mxu0 0.0
        %308 = vmatpush1.msra.mxu0 0.0
        %309 = vmatprep.subr.mxu0 0.0
        %310 = vmatpush1.msra.mxu0 0.0
        %311 = vmatprep.subr.mxu0 0.0
        %312 = vmatpush1.msra.mxu0 0.0
        %313 = vmatprep.subr.mxu0 0.0
        %314 = vmatpush1.msra.mxu0 0.0
        %315 = vmatprep.subr.mxu0 0.0
        %316 = vmatpush1.msra.mxu0 0.0
        %317 = vmatprep.subr.mxu0 0.0
        %318 = vmatpush1.msra.mxu0 0.0
        %319 = vmatprep.subr.mxu0 0.0
        %320 = vmatpush1.msra.mxu0 0.0
        %321 = vmatprep.subr.mxu0 0.0
        %322 = vmatpush1.msra.mxu0 0.0
        %323 = vmatprep.subr.mxu0 0.0
        %324 = vmatpush1.msra.mxu0 0.0
        %325 = vmatprep.subr.mxu0 0.0
        %326 = vmatpush1.msra.mxu0 0.0
        %327 = vmatprep.subr.mxu0 0.0
        %328 = vmatpush1.msra.mxu0 0.0
        %329 = vmatprep.subr.mxu0 0.0
        %330 = vmatpush1.msra.mxu0 0.0
        %331 = vmatprep.subr.mxu0 0.0
        %332 = vmatpush1.msra.mxu0 0.0
        %333 = vmatprep.subr.mxu0 0.0
        %334 = vmatpush1.msra.mxu0 0.0
        %335 = vmatprep.subr.mxu0 0.0
        %336 = vmatpush1.msra.mxu0 0.0
        %337 = vmatprep.subr.mxu0 0.0
        %338 = vmatpush1.msra.mxu0 0.0
        %339 = vmatprep.subr.mxu0 0.0
        %340 = vmatpush1.msra.mxu0 0.0
        %341 = vmatprep.subr.mxu0 0.0
        %342 = vmatpush1.msra.mxu0 0.0
        %343 = vmatprep.subr.mxu0 0.0
        %344 = vmatpush1.msra.mxu0 0.0
        %345 = vmatprep.mubr.f32.mxu0 0.0
        %346 = vmatmul.mubr.f32.gmra.mrb[0].mxu0 %v272
        %v347 = vpop.f32.mrb[0].mxu0
        %v348 = vadd.f32 0.0, %v347
        %v349 = vpop.f32.mrb[0].mxu0
        %v350 = vadd.f32 0.0, %v349
        %351 = vdwg.mxu0
        %352 = vst [vmem:[%s249] sm:$0xff] %v348
        %353 = vst [vmem:[%s249 + $0x8] sm:$0xff] %v350
        %v354 = vadd.f32 %v348, %v350
        %355 = vadd.xlane.f32.xlu0 %v354
        %v356 = vpop.xlane.xlu0 %355
        %vm357 = vcmask 7168
        %358 = vst.msk [vmem:[%s254] sm:$0xff] %vm357, %v356
        %v359 = vmul.f32 %v348, %v348
        %v360 = vmul.f32 %v350, %v350
        %v361 = vadd.f32 %v359, %v360
        %362 = vadd.xlane.f32.xlu0 %v361
        %v363 = vpop.xlane.xlu0 %362
        %364 = vst.msk [vmem:[%s258] sm:$0xff] %vm357, %v363
        %s365 = smul.u32 2, %s16
        %p366 = scmp.lt.s32.totalorder %s365, 3
        %s367 = scalar_select %p366, %s365, 3
        %s368 = smul.addr %s367, 8
        %s369 = scalar_lea.vmem %s2, %s368
        %p370 = scmp.lt.s32.totalorder %s16, 1
        %s371 = scalar_select %p370, %s16, 1
        %s372 = smul.addr %s371, 8
        %s373 = scalar_lea.vmem %s3, %s372
        %p374 = scmp.lt.s32.totalorder %s16, 1
        %s375 = scalar_select %p374, %s16, 1
        %s376 = smul.addr %s375, 8
        %s377 = scalar_lea.vmem %s4, %s376
        // Predicated region
        $region52: #{unet_conv2_forward.4} parent=46 // pred_check
          %p378 = pneg %p81
        $region53: #{unet_conv2_forward.4} parent=46 // pred_check_branch
          %380 = sbr.rel (%p378) target = $region55
        $region54: #{unet_conv2_forward.4} parent=46 // pred_region
          %s381 = smul.u32 2, %s16
        $region55: #{unet_conv2_forward.4} parent=46 // pred_fallthru
          _
        // Predicated region
        $region56: #{unet_conv2_forward.4} parent=46 // pred_check
          %p382 = pneg %p107
        $region57: #{unet_conv2_forward.4} parent=46 // pred_check_branch
          %384 = sbr.rel (%p382) target = $region59
        $region58: #{unet_conv2_forward.4} parent=46 // pred_region
          _
        $region59: #{unet_conv2_forward.4} parent=46 // pred_fallthru
          _
        // Predicated region
        $region60: #{unet_conv2_forward.4} parent=46 // pred_check
          %p385 = pneg %p133
        $region61: #{unet_conv2_forward.4} parent=46 // pred_check_branch
          %387 = sbr.rel (%p385) target = $region63
        $region62: #{unet_conv2_forward.4} parent=46 // pred_region
          _
        $region63: #{unet_conv2_forward.4} parent=46 // pred_fallthru
          _
      $region47: #{unet_conv2_forward.4} parent=5 // pred_fallthru
        _
      %p388 = scmp.le.s32.totalorder 2, %s11
      // Predicated region
      $region64: #{unet_conv2_forward.4} parent=5 // pred_check
        %p389 = pneg %p388
      $region65: #{unet_conv2_forward.4} parent=5 // pred_check_branch
        %391 = sbr.rel (%p389) target = $region67
      $region66: #{unet_conv2_forward.4} parent=5 // pred_region
        %s392 = ssub.s32 %s11, 2
        // Predicated region
        $region68: #{unet_conv2_forward.4} parent=66 // pred_check
          %p393 = pneg %p87
        $region69: #{unet_conv2_forward.4} parent=66 // pred_check_branch
          %395 = sbr.rel (%p393) target = $region71
        $region70: #{unet_conv2_forward.4} parent=66 // pred_region
          %s396 = smul.u32 2, %s17
          %p397 = scmp.lt.s32.totalorder %s396, 3
          %s398 = scalar_select %p397, %s396, 3
          %s399 = smul.addr %s398, 8
          %s400 = scalar_lea.vmem %s2, %s399
        $region71: #{unet_conv2_forward.4} parent=66 // pred_fallthru
          _
        // Predicated region
        $region72: #{unet_conv2_forward.4} parent=66 // pred_check
          %p401 = pneg %p113
        $region73: #{unet_conv2_forward.4} parent=66 // pred_check_branch
          %403 = sbr.rel (%p401) target = $region75
        $region74: #{unet_conv2_forward.4} parent=66 // pred_region
          %p404 = scmp.lt.s32.totalorder %s17, 1
          %s405 = scalar_select %p404, %s17, 1
          %s406 = smul.addr %s405, 8
          %s407 = scalar_lea.vmem %s3, %s406
        $region75: #{unet_conv2_forward.4} parent=66 // pred_fallthru
          _
        // Predicated region
        $region76: #{unet_conv2_forward.4} parent=66 // pred_check
          %p408 = pneg %p139
        $region77: #{unet_conv2_forward.4} parent=66 // pred_check_branch
          %410 = sbr.rel (%p408) target = $region79
        $region78: #{unet_conv2_forward.4} parent=66 // pred_region
          %p411 = scmp.lt.s32.totalorder %s17, 1
          %s412 = scalar_select %p411, %s17, 1
          %s413 = smul.addr %s412, 8
          %s414 = scalar_lea.vmem %s4, %s413
        $region79: #{unet_conv2_forward.4} parent=66 // pred_fallthru
          _
      $region67: #{unet_conv2_forward.4} parent=5 // pred_fallthru
        _
    $region6: #{unet_conv2_forward.4} parent=1 // loop_footer
      %s15 = sadd.s32 1, %s11
    $region7: #{unet_conv2_forward.4} parent=1 // loop_footer_branch
      %10 = sbr.rel target = $region3
    $region8: #{unet_conv2_forward.4} parent=1 // loop_exit
      _

// kernel: unet_conv2_forward.6
$region0: #{unet_conv2_forward.6}
  #allocation0 [shape = 'u32[]', space=smem, size = 0x4, offset = 0x4, fixed_abs, tag = 'smem constant byte address 0x4 - core index']
  #allocation1 [shape = 'u32[144,128]{1,0:T(1,128)}', space=vmem, size = 0x12000, scoped, tag = 'internal scratch']
  %s0 = inlined_call_operand.vmem [shape: f32[8,72], index: 0, kind: input, shape index: {}]
  %s1 = inlined_call_operand.vmem [shape: f32[72,512], index: 1, kind: input, shape index: {}]
  %s2 = inlined_call_operand.vmem [shape: f32[8,512], index: 2, kind: output, shape index: {0}]
  %s3 = inlined_call_operand.vmem [shape: f32[2,8,1], index: 3, kind: output, shape index: {1}]
  %s4 = inlined_call_operand.vmem [shape: f32[2,8,1], index: 4, kind: output, shape index: {2}]
  %5 = xla_tuple %s2, %s3, %s4
  %s6 = sld [smem:[#allocation0]]
  $region80: #{unet_conv2_forward.6} parent=0
    _
  %s8 = ssub.s32 1, %s6
  %s9 = scalar_select 0, %s8, %s6
  $region1: #{unet_conv2_forward.6} parent=0
    #allocation2 [shape = 'u8[147456]{0}', space=vmem, size = 0x24000, scoped, tag = 'input window, operand 1']
    loop: start=0, step=1, limit=4
    $region2: #{unet_conv2_forward.6} parent=1 // loop_pre_header
      _
    $region3: #{unet_conv2_forward.6} parent=1 // loop_header
      %s11 = sphi 0, %s15
      %p12 = scmp.ge.s32.totalorder %s11, 4
      %s19 = sphi 0, %s19
      %s21 = sphi 0, %s19
      %s22 = sphi 0, %s21
      %s36 = sphi 0, %s22
      %s42 = sphi 0, %s44
      %s45 = sphi 0, %s42
      %s46 = sphi 0, %s45
      %s62 = sphi 0, %s46
      %s68 = sphi 0, %s70
      %s71 = sphi 0, %s68
      %s72 = sphi 0, %s71
      %s88 = sphi 0, %s72
      %s94 = sphi 0, %s96
      %s97 = sphi 0, %s94
      %s98 = sphi 0, %s97
      %s114 = sphi 0, %s98
      %s120 = sphi 0, %s122
      %s123 = sphi 0, %s120
      %s124 = sphi 0, %s123
      %s140 = sphi 0, %s124
    $region4: #{unet_conv2_forward.6} parent=1 // loop_header_branch
      %14 = sbr.rel (%p12) target = $region8
    $region5: #{unet_conv2_forward.6} parent=1 // loop_body
      %s16 = ssub.s32 %s11, 1
      %s17 = ssub.s32 %s11, 2
      %s18 = sadd.s32 %s11, 1
      %s20 = sadd.s32 %s19, 1
      %p23 = scmp.eq.s32.totalorder %s11, 1
      %p24 = scmp.ne.s32.totalorder %s19, %s21
      %p25 = scmp.eq.s32.totalorder %s11, 0
      %p26 = por %p24, %p25
      %p27 = scmp.ne.s32.totalorder %s19, %s21
      %p28 = scmp.eq.s32.totalorder %s16, 1
      %p29 = por %p27, %p28
      %p30 = scmp.ne.s32.totalorder %s21, %s22
      %p31 = scmp.eq.s32.totalorder %s16, 0
      %p32 = por %p30, %p31
      %p33 = scmp.ne.s32.totalorder %s21, %s22
      %p34 = scmp.eq.s32.totalorder %s17, 1
      %p35 = por %p33, %p34
      %p37 = scmp.ne.s32.totalorder %s22, %s36
      %p38 = scmp.eq.s32.totalorder %s17, 0
      %p39 = por %p37, %p38
      %s40 = ssub.s32 %s11, %s18
      %p41 = scmp.eq.s32.totalorder %s40, 0
      %s43 = sadd.s32 %s42, 1
      %s44 = scalar_select %p41, %s42, %s43
      %p47 = pneg %p41
      %p48 = scmp.eq.s32.totalorder %s11, 1
      %p49 = por %p47, %p48
      %p50 = scmp.ne.s32.totalorder %s42, %s45
      %p51 = scmp.eq.s32.totalorder %s11, 0
      %p52 = por %p50, %p51
      %p53 = scmp.ne.s32.totalorder %s42, %s45
      %p54 = scmp.eq.s32.totalorder %s16, 1
      %p55 = por %p53, %p54
      %p56 = scmp.ne.s32.totalorder %s45, %s46
      %p57 = scmp.eq.s32.totalorder %s16, 0
      %p58 = por %p56, %p57
      %p59 = scmp.ne.s32.totalorder %s45, %s46
      %p60 = scmp.eq.s32.totalorder %s17, 1
      %p61 = por %p59, %p60
      %p63 = scmp.ne.s32.totalorder %s46, %s62
      %p64 = scmp.eq.s32.totalorder %s17, 0
      %p65 = por %p63, %p64
      %s66 = ssub.s32 %s11, %s18
      %p67 = scmp.eq.s32.totalorder %s66, 0
      %s69 = sadd.s32 %s68, 1
      %s70 = scalar_select %p67, %s68, %s69
      %p73 = pneg %p67
      %p74 = scmp.eq.s32.totalorder %s11, 1
      %p75 = por %p73, %p74
      %p76 = scmp.ne.s32.totalorder %s68, %s71
      %p77 = scmp.eq.s32.totalorder %s11, 0
      %p78 = por %p76, %p77
      %p79 = scmp.ne.s32.totalorder %s68, %s71
      %p80 = scmp.eq.s32.totalorder %s16, 1
      %p81 = por %p79, %p80
      %p82 = scmp.ne.s32.totalorder %s71, %s72
      %p83 = scmp.eq.s32.totalorder %s16, 0
      %p84 = por %p82, %p83
      %p85 = scmp.ne.s32.totalorder %s71, %s72
      %p86 = scmp.eq.s32.totalorder %s17, 1
      %p87 = por %p85, %p86
      %p89 = scmp.ne.s32.totalorder %s72, %s88
      %p90 = scmp.eq.s32.totalorder %s17, 0
      %p91 = por %p89, %p90
      %s92 = ssub.s32 %s11, %s18
      %p93 = scmp.eq.s32.totalorder %s92, 0
      %s95 = sadd.s32 %s94, 1
      %s96 = scalar_select %p93, %s94, %s95
      %p99 = pneg %p93
      %p100 = scmp.eq.s32.totalorder %s11, 1
      %p101 = por %p99, %p100
      %p102 = scmp.ne.s32.totalorder %s94, %s97
      %p103 = scmp.eq.s32.totalorder %s11, 0
      %p104 = por %p102, %p103
      %p105 = scmp.ne.s32.totalorder %s94, %s97
      %p106 = scmp.eq.s32.totalorder %s16, 1
      %p107 = por %p105, %p106
      %p108 = scmp.ne.s32.totalorder %s97, %s98
      %p109 = scmp.eq.s32.totalorder %s16, 0
      %p110 = por %p108, %p109
      %p111 = scmp.ne.s32.totalorder %s97, %s98
      %p112 = scmp.eq.s32.totalorder %s17, 1
      %p113 = por %p111, %p112
      %p115 = scmp.ne.s32.totalorder %s98, %s114
      %p116 = scmp.eq.s32.totalorder %s17, 0
      %p117 = por %p115, %p116
      %s118 = ssub.s32 %s11, %s18
      %p119 = scmp.eq.s32.totalorder %s118, 0
      %s121 = sadd.s32 %s120, 1
      %s122 = scalar_select %p119, %s120, %s121
      %p125 = pneg %p119
      %p126 = scmp.eq.s32.totalorder %s11, 1
      %p127 = por %p125, %p126
      %p128 = scmp.ne.s32.totalorder %s120, %s123
      %p129 = scmp.eq.s32.totalorder %s11, 0
      %p130 = por %p128, %p129
      %p131 = scmp.ne.s32.totalorder %s120, %s123
      %p132 = scmp.eq.s32.totalorder %s16, 1
      %p133 = por %p131, %p132
      %p134 = scmp.ne.s32.totalorder %s123, %s124
      %p135 = scmp.eq.s32.totalorder %s16, 0
      %p136 = por %p134, %p135
      %p137 = scmp.ne.s32.totalorder %s123, %s124
      %p138 = scmp.eq.s32.totalorder %s17, 1
      %p139 = por %p137, %p138
      %p141 = scmp.ne.s32.totalorder %s124, %s140
      %p142 = scmp.eq.s32.totalorder %s17, 0
      %p143 = por %p141, %p142
      %p144 = scmp.le.s32.totalorder 1, %s11
      %p145 = scmp.lt.s32.totalorder %s11, 3
      %p146 = pnand %p144, %p145
      %p147 = pneg %p146
      // Predicated region
      $region9: #{unet_conv2_forward.6} parent=5 // pred_check
        _
      $region10: #{unet_conv2_forward.6} parent=5 // pred_check_branch
        %149 = sbr.rel (%p146) target = $region12
      $region11: #{unet_conv2_forward.6} parent=5 // pred_region
        %s150 = ssub.s32 %s11, 1
        // Predicated region
        $region13: #{unet_conv2_forward.6} parent=11 // pred_check
          %p151 = pneg %p32
        $region14: #{unet_conv2_forward.6} parent=11 // pred_check_branch
          %153 = sbr.rel (%p151) target = $region16
        $region15: #{unet_conv2_forward.6} parent=11 // pred_region
          _
        $region16: #{unet_conv2_forward.6} parent=11 // pred_fallthru
          _
      $region12: #{unet_conv2_forward.6} parent=5 // pred_fallthru
        _
      %p154 = scmp.lt.s32.totalorder %s11, 2
      // Predicated region
      $region17: #{unet_conv2_forward.6} parent=5 // pred_check
        %p155 = pneg %p154
      $region18: #{unet_conv2_forward.6} parent=5 // pred_check_branch
        %157 = sbr.rel (%p155) target = $region20
      $region19: #{unet_conv2_forward.6} parent=5 // pred_region
        // Predicated region
        $region21: #{unet_conv2_forward.6} parent=19 // pred_check
          %p158 = pneg %p52
        $region22: #{unet_conv2_forward.6} parent=19 // pred_check_branch
          %160 = sbr.rel (%p158) target = $region24
        $region23: #{unet_conv2_forward.6} parent=19 // pred_region
          %s161 = sand.u32 %s42, 1
          %s162 = sand.u32 %s42, 1
          %s163 = smul.addr %s162, 144
          %s164 = scalar_lea.vmem [#allocation2], %s163
          %s165 = smul.u32 2, %s11
          %s166 = smul.addr %s165, 8
          %s167 = scalar_lea.vmem %s1, %s166
          // Predicated region
          $region25: #{unet_conv2_forward.6} parent=23 // pred_check
            _
          $region26: #{unet_conv2_forward.6} parent=23 // pred_check_branch
            %169 = sbr.rel (0) target = $region28
          $region27: #{unet_conv2_forward.6} parent=23 // pred_region
            // Predicated region
            $region29: #{unet_conv2_forward.6} parent=27 // pred_check
              _
            $region30: #{unet_conv2_forward.6} parent=27 // pred_check_branch
              %171 = sbr.rel (0) target = $region32
            $region31: #{unet_conv2_forward.6} parent=27 // pred_region
              loop: start=0, step=1, limit=1
              $region33: #{unet_conv2_forward.6} parent=31 // loop_pre_header
                _
              $region34: #{unet_conv2_forward.6} parent=31 // loop_header
                %s173 = sphi 0, %s177
                %p174 = scmp.ge.s32.totalorder %s173, 1
                %s178 = sphi %s167, %s167
                %s179 = sphi %s164, %s164
              $region35: #{unet_conv2_forward.6} parent=31 // loop_header_branch
                %176 = sbr.rel (%p174) target = $region39
              $region36: #{unet_conv2_forward.6} parent=31 // loop_body
                %v180 = vld [vmem:[%s178] sm:$0xff]
                %181 = vst [vmem:[%s179] sm:$0xff] %v180
                %v182 = vld [vmem:[%s178 + $0x8] sm:$0xff]
                %183 = vst [vmem:[%s179 + $0x8] sm:$0xff] %v182
                %v184 = vld [vmem:[%s178 + $0x20] sm:$0xff]
                %185 = vst [vmem:[%s179 + $0x10] sm:$0xff] %v184
                %v186 = vld [vmem:[%s178 + $0x28] sm:$0xff]
                %187 = vst [vmem:[%s179 + $0x18] sm:$0xff] %v186
                %v188 = vld [vmem:[%s178 + $0x40] sm:$0xff]
                %189 = vst [vmem:[%s179 + $0x20] sm:$0xff] %v188
                %v190 = vld [vmem:[%s178 + $0x48] sm:$0xff]
                %191 = vst [vmem:[%s179 + $0x28] sm:$0xff] %v190
                %v192 = vld [vmem:[%s178 + $0x60] sm:$0xff]
                %193 = vst [vmem:[%s179 + $0x30] sm:$0xff] %v192
                %v194 = vld [vmem:[%s178 + $0x68] sm:$0xff]
                %195 = vst [vmem:[%s179 + $0x38] sm:$0xff] %v194
                %v196 = vld [vmem:[%s178 + $0x80] sm:$0xff]
                %197 = vst [vmem:[%s179 + $0x40] sm:$0xff] %v196
                %v198 = vld [vmem:[%s178 + $0x88] sm:$0xff]
                %199 = vst [vmem:[%s179 + $0x48] sm:$0xff] %v198
                %v200 = vld [vmem:[%s178 + $0xa0] sm:$0xff]
                %201 = vst [vmem:[%s179 + $0x50] sm:$0xff] %v200
                %v202 = vld [vmem:[%s178 + $0xa8] sm:$0xff]
                %203 = vst [vmem:[%s179 + $0x58] sm:$0xff] %v202
                %v204 = vld [vmem:[%s178 + $0xc0] sm:$0xff]
                %205 = vst [vmem:[%s179 + $0x60] sm:$0xff] %v204
                %v206 = vld [vmem:[%s178 + $0xc8] sm:$0xff]
                %207 = vst [vmem:[%s179 + $0x68] sm:$0xff] %v206
                %v208 = vld [vmem:[%s178 + $0xe0] sm:$0xff]
                %209 = vst [vmem:[%s179 + $0x70] sm:$0xff] %v208
                %v210 = vld [vmem:[%s178 + $0xe8] sm:$0xff]
                %211 = vst [vmem:[%s179 + $0x78] sm:$0xff] %v210
                %v212 = vld [vmem:[%s178 + $0x100] sm:$0xff]
                %213 = vst [vmem:[%s179 + $0x80] sm:$0xff] %v212
                %v214 = vld [vmem:[%s178 + $0x108] sm:$0xff]
                %215 = vst [vmem:[%s179 + $0x88] sm:$0xff] %v214
              $region37: #{unet_conv2_forward.6} parent=31 // loop_footer
                %s177 = sadd.s32 1, %s173
              $region38: #{unet_conv2_forward.6} parent=31 // loop_footer_branch
                %172 = sbr.rel target = $region34
              $region39: #{unet_conv2_forward.6} parent=31 // loop_exit
                _
            $region32: #{unet_conv2_forward.6} parent=27 // pred_fallthru
              _
            // Predicated region
            $region40: #{unet_conv2_forward.6} parent=27 // pred_check
              _
            $region41: #{unet_conv2_forward.6} parent=27 // pred_check_branch
              %217 = sbr.rel target = $region43
            $region42: #{unet_conv2_forward.6} parent=27 // pred_region
              _
            $region43: #{unet_conv2_forward.6} parent=27 // pred_fallthru
              _
          $region28: #{unet_conv2_forward.6} parent=23 // pred_fallthru
            _
          %218 = vnop
        $region24: #{unet_conv2_forward.6} parent=19 // pred_fallthru
          _
      $region20: #{unet_conv2_forward.6} parent=5 // pred_fallthru
        _
      %p219 = scmp.le.s32.totalorder 1, %s11
      %p220 = scmp.lt.s32.totalorder %s11, 3
      %p221 = pnand %p219, %p220
      %p222 = pneg %p221
      // Predicated region
      $region44: #{unet_conv2_forward.6} parent=5 // pred_check
        _
      $region45: #{unet_conv2_forward.6} parent=5 // pred_check_branch
        %224 = sbr.rel (%p221) target = $region47
      $region46: #{unet_conv2_forward.6} parent=5 // pred_region
        %s225 = ssub.s32 %s11, 1
        %s226 = sand.u32 %s45, 1
        %s227 = sand.u32 %s45, 1
        %s228 = smul.addr %s227, 144
        %s229 = scalar_lea.vmem [#allocation2], %s228
        // Predicated region
        $region48: #{unet_conv2_forward.6} parent=46 // pred_check
          %p230 = pneg %p58
        $region49: #{unet_conv2_forward.6} parent=46 // pred_check_branch
          %232 = sbr.rel (%p230) target = $region51
        $region50: #{unet_conv2_forward.6} parent=46 // pred_region
          _
        $region51: #{unet_conv2_forward.6} parent=46 // pred_fallthru
          _
        %p233 = pneg %p32
        %p234 = pneg %p29
        %s235 = sand.u32 %s45, 1
        %s236 = sand.u32 %s45, 1
        %s237 = smul.addr %s236, 144
        %s238 = scalar_lea.vmem [#allocation2], %s237
        %p239 = pneg %p58
        %p240 = pneg %p55
        %p241 = pneg %p84
        %p242 = pneg %p81
        %s243 = smul.u32 2, %s16
        %p244 = scmp.lt.s32.totalorder %s243, 3
        %s245 = scalar_select %p244, %s243, 3
        %s246 = smul.addr %s245, 8
        %s247 = scalar_lea.vmem %s2, %s246
        %p248 = pneg %p110
        %p249 = pneg %p107
        %p250 = scmp.lt.s32.totalorder %s16, 1
        %s251 = scalar_select %p250, %s16, 1
        %s252 = smul.addr %s251, 8
        %s253 = scalar_lea.vmem %s3, %s252
        %p254 = pneg %p136
        %p255 = pneg %p133
        %p256 = scmp.lt.s32.totalorder %s16, 1
        %s257 = scalar_select %p256, %s16, 1
        %s258 = smul.addr %s257, 8
        %s259 = scalar_lea.vmem %s4, %s258
        %s260 = smul.u32 2, %s16
        %s261 = smul.u32 2, %s16
        %p262 = scmp.lt.s32.totalorder %s261, 3
        %s263 = scalar_select %p262, %s261, 3
        %s264 = smul.addr %s263, 8
        %s265 = scalar_lea.vmem %s2, %s264
        %s266 = smul.u32 2, %s16
        %p267 = scmp.lt.s32.totalorder %s16, 1
        %s268 = scalar_select %p267, %s16, 1
        %s269 = smul.addr %s268, 8
        %s270 = scalar_lea.vmem %s3, %s269
        %p271 = scmp.lt.s32.totalorder %s16, 1
        %s272 = scalar_select %p271, %s16, 1
        %s273 = smul.addr %s272, 8
        %s274 = scalar_lea.vmem %s4, %s273
        %v275 = vld [vmem:[%s0] sm:$0xff]
        %v276 = vld [vmem:[%s229] sm:$0xff]
        %v277 = vld [vmem:[%s229 + $0x8] sm:$0xff]
        %v278 = vld [vmem:[%s229 + $0x10] sm:$0xff]
        %v279 = vld [vmem:[%s229 + $0x18] sm:$0xff]
        %v280 = vld [vmem:[%s229 + $0x20] sm:$0xff]
        %v281 = vld [vmem:[%s229 + $0x28] sm:$0xff]
        %v282 = vld [vmem:[%s229 + $0x30] sm:$0xff]
        %v283 = vld [vmem:[%s229 + $0x38] sm:$0xff]
        %v284 = vld [vmem:[%s229 + $0x40] sm:$0xff]
        %v285 = vld [vmem:[%s229 + $0x48] sm:$0xff]
        %v286 = vld [vmem:[%s229 + $0x50] sm:$0xff]
        %v287 = vld [vmem:[%s229 + $0x58] sm:$0xff]
        %v288 = vld [vmem:[%s229 + $0x60] sm:$0xff]
        %v289 = vld [vmem:[%s229 + $0x68] sm:$0xff]
        %v290 = vld [vmem:[%s229 + $0x70] sm:$0xff]
        %v291 = vld [vmem:[%s229 + $0x78] sm:$0xff]
        %v292 = vld [vmem:[%s229 + $0x80] sm:$0xff]
        %v293 = vld [vmem:[%s229 + $0x88] sm:$0xff]
        %vm294 = vcmask 588800
        %v296 = vsel %vm294, %v275, 0
        %298 = vmatprep.subr.mxu0 %v277
        %299 = vmatpush1.msra.mxu0 %v276
        %300 = vmatprep.subr.mxu0 %v279
        %301 = vmatpush1.msra.mxu0 %v278
        %302 = vmatprep.subr.mxu0 %v281
        %303 = vmatpush1.msra.mxu0 %v280
        %304 = vmatprep.subr.mxu0 %v283
        %305 = vmatpush1.msra.mxu0 %v282
        %306 = vmatprep.subr.mxu0 %v285
        %307 = vmatpush1.msra.mxu0 %v284
        %308 = vmatprep.subr.mxu0 %v287
        %309 = vmatpush1.msra.mxu0 %v286
        %310 = vmatprep.subr.mxu0 %v289
        %311 = vmatpush1.msra.mxu0 %v288
        %312 = vmatprep.subr.mxu0 %v291
        %313 = vmatpush1.msra.mxu0 %v290
        %314 = vmatprep.subr.mxu0 %v293
        %315 = vmatpush1.msra.mxu0 %v292
        %316 = vmatprep.subr.mxu0 0.0
        %317 = vmatpush1.msra.mxu0 0.0
        %318 = vmatprep.subr.mxu0 0.0
        %319 = vmatpush1.msra.mxu0 0.0
        %320 = vmatprep.subr.mxu0 0.0
        %321 = vmatpush1.msra.mxu0 0.0
        %322 = vmatprep.subr.mxu0 0.0
        %323 = vmatpush1.msra.mxu0 0.0
        %324 = vmatprep.subr.mxu0 0.0
        %325 = vmatpush1.msra.mxu0 0.0
        %326 = vmatprep.subr.mxu0 0.0
        %327 = vmatpush1.msra.mxu0 0.0
        %328 = vmatprep.subr.mxu0 0.0
        %329 = vmatpush1.msra.mxu0 0.0
        %330 = vmatprep.subr.mxu0 0.0
        %331 = vmatpush1.msra.mxu0 0.0
        %332 = vmatprep.subr.mxu0 0.0
        %333 = vmatpush1.msra.mxu0 0.0
        %334 = vmatprep.subr.mxu0 0.0
        %335 = vmatpush1.msra.mxu0 0.0
        %336 = vmatprep.subr.mxu0 0.0
        %337 = vmatpush1.msra.mxu0 0.0
        %338 = vmatprep.subr.mxu0 0.0
        %339 = vmatpush1.msra.mxu0 0.0
        %340 = vmatprep.subr.mxu0 0.0
        %341 = vmatpush1.msra.mxu0 0.0
        %342 = vmatprep.subr.mxu0 0.0
        %343 = vmatpush1.msra.mxu0 0.0
        %344 = vmatprep.subr.mxu0 0.0
        %345 = vmatpush1.msra.mxu0 0.0
        %346 = vmatprep.subr.mxu0 0.0
        %347 = vmatpush1.msra.mxu0 0.0
        %348 = vmatprep.subr.mxu0 0.0
        %349 = vmatpush1.msra.mxu0 0.0
        %350 = vmatprep.subr.mxu0 0.0
        %351 = vmatpush1.msra.mxu0 0.0
        %352 = vmatprep.subr.mxu0 0.0
        %353 = vmatpush1.msra.mxu0 0.0
        %354 = vmatprep.subr.mxu0 0.0
        %355 = vmatpush1.msra.mxu0 0.0
        %356 = vmatprep.subr.mxu0 0.0
        %357 = vmatpush1.msra.mxu0 0.0
        %358 = vmatprep.subr.mxu0 0.0
        %359 = vmatpush1.msra.mxu0 0.0
        %360 = vmatprep.subr.mxu0 0.0
        %361 = vmatpush1.msra.mxu0 0.0
        %362 = vmatprep.mubr.f32.mxu0 0.0
        %363 = vmatmul.mubr.f32.gmra.mrb[0].mxu0 %v296
        %v364 = vpop.f32.mrb[0].mxu0
        %v365 = vadd.f32 0.0, %v364
        %v366 = vpop.f32.mrb[0].mxu0
        %v367 = vadd.f32 0.0, %v366
        %368 = vdwg.mxu0
        %369 = vst [vmem:[%s265] sm:$0xff] %v365
        %370 = vst [vmem:[%s265 + $0x8] sm:$0xff] %v367
        %v371 = vadd.f32 %v365, %v367
        %372 = vadd.xlane.f32.xlu0 %v371
        %v373 = vpop.xlane.xlu0 %372
        %vm374 = vcmask 7168
        %375 = vst.msk [vmem:[%s270] sm:$0xff] %vm374, %v373
        %v376 = vmul.f32 %v365, %v365
        %v377 = vmul.f32 %v367, %v367
        %v378 = vadd.f32 %v376, %v377
        %379 = vadd.xlane.f32.xlu0 %v378
        %v380 = vpop.xlane.xlu0 %379
        %381 = vst.msk [vmem:[%s274] sm:$0xff] %vm374, %v380
        %s382 = smul.u32 2, %s16
        %p383 = scmp.lt.s32.totalorder %s382, 3
        %s384 = scalar_select %p383, %s382, 3
        %s385 = smul.addr %s384, 8
        %s386 = scalar_lea.vmem %s2, %s385
        %p387 = scmp.lt.s32.totalorder %s16, 1
        %s388 = scalar_select %p387, %s16, 1
        %s389 = smul.addr %s388, 8
        %s390 = scalar_lea.vmem %s3, %s389
        %p391 = scmp.lt.s32.totalorder %s16, 1
        %s392 = scalar_select %p391, %s16, 1
        %s393 = smul.addr %s392, 8
        %s394 = scalar_lea.vmem %s4, %s393
        // Predicated region
        $region52: #{unet_conv2_forward.6} parent=46 // pred_check
          %p395 = pneg %p81
        $region53: #{unet_conv2_forward.6} parent=46 // pred_check_branch
          %397 = sbr.rel (%p395) target = $region55
        $region54: #{unet_conv2_forward.6} parent=46 // pred_region
          %s398 = smul.u32 2, %s16
        $region55: #{unet_conv2_forward.6} parent=46 // pred_fallthru
          _
        // Predicated region
        $region56: #{unet_conv2_forward.6} parent=46 // pred_check
          %p399 = pneg %p107
        $region57: #{unet_conv2_forward.6} parent=46 // pred_check_branch
          %401 = sbr.rel (%p399) target = $region59
        $region58: #{unet_conv2_forward.6} parent=46 // pred_region
          _
        $region59: #{unet_conv2_forward.6} parent=46 // pred_fallthru
          _
        // Predicated region
        $region60: #{unet_conv2_forward.6} parent=46 // pred_check
          %p402 = pneg %p133
        $region61: #{unet_conv2_forward.6} parent=46 // pred_check_branch
          %404 = sbr.rel (%p402) target = $region63
        $region62: #{unet_conv2_forward.6} parent=46 // pred_region
          _
        $region63: #{unet_conv2_forward.6} parent=46 // pred_fallthru
          _
      $region47: #{unet_conv2_forward.6} parent=5 // pred_fallthru
        _
      %p405 = scmp.le.s32.totalorder 2, %s11
      // Predicated region
      $region64: #{unet_conv2_forward.6} parent=5 // pred_check
        %p406 = pneg %p405
      $region65: #{unet_conv2_forward.6} parent=5 // pred_check_branch
        %408 = sbr.rel (%p406) target = $region67
      $region66: #{unet_conv2_forward.6} parent=5 // pred_region
        %s409 = ssub.s32 %s11, 2
        // Predicated region
        $region68: #{unet_conv2_forward.6} parent=66 // pred_check
          %p410 = pneg %p87
        $region69: #{unet_conv2_forward.6} parent=66 // pred_check_branch
          %412 = sbr.rel (%p410) target = $region71
        $region70: #{unet_conv2_forward.6} parent=66 // pred_region
          %s413 = smul.u32 2, %s17
          %p414 = scmp.lt.s32.totalorder %s413, 3
          %s415 = scalar_select %p414, %s413, 3
          %s416 = smul.addr %s415, 8
          %s417 = scalar_lea.vmem %s2, %s416
        $region71: #{unet_conv2_forward.6} parent=66 // pred_fallthru
          _
        // Predicated region
        $region72: #{unet_conv2_forward.6} parent=66 // pred_check
          %p418 = pneg %p113
        $region73: #{unet_conv2_forward.6} parent=66 // pred_check_branch
          %420 = sbr.rel (%p418) target = $region75
        $region74: #{unet_conv2_forward.6} parent=66 // pred_region
          %p421 = scmp.lt.s32.totalorder %s17, 1
          %s422 = scalar_select %p421, %s17, 1
          %s423 = smul.addr %s422, 8
          %s424 = scalar_lea.vmem %s3, %s423
        $region75: #{unet_conv2_forward.6} parent=66 // pred_fallthru
          _
        // Predicated region
        $region76: #{unet_conv2_forward.6} parent=66 // pred_check
          %p425 = pneg %p139
        $region77: #{unet_conv2_forward.6} parent=66 // pred_check_branch
          %427 = sbr.rel (%p425) target = $region79
        $region78: #{unet_conv2_forward.6} parent=66 // pred_region
          %p428 = scmp.lt.s32.totalorder %s17, 1
          %s429 = scalar_select %p428, %s17, 1
          %s430 = smul.addr %s429, 8
          %s431 = scalar_lea.vmem %s4, %s430
        $region79: #{unet_conv2_forward.6} parent=66 // pred_fallthru
          _
      $region67: #{unet_conv2_forward.6} parent=5 // pred_fallthru
        _
    $region6: #{unet_conv2_forward.6} parent=1 // loop_footer
      %s15 = sadd.s32 1, %s11
    $region7: #{unet_conv2_forward.6} parent=1 // loop_footer_branch
      %10 = sbr.rel target = $region3
    $region8: #{unet_conv2_forward.6} parent=1 // loop_exit
      _

</llo_original>
